<compile_context>
chip_gen: v7x
topology: tpu7x:2x2x1
jax: 0.10.0
libtpu: 0.0.40
codegen_flags: <defaults>
</compile_context>

<pallas_src>
import jax
import jax.numpy as jnp
from jax.experimental import pallas as pl
from jax.experimental.pallas import tpu as pltpu

IN_F = 2                     # nn.Linear(2, 16) input features
HID = 16                     # hidden width
LANE = 128                   # batch lane quantum
MAX_TB = 32 * 1024           # max batch lanes per grid step (~<10 MiB VMEM at f32)
VMEM_LIMIT = 32 * 1024 * 1024


def _mlp_kernel(x_ref, w1_ref, b1_ref, w2_ref, b2_ref, o_ref):
    # x_ref: [IN_F, tb]   w1_ref: [HID, IN_F]  b1_ref: [HID, 1]
    # w2_ref: [1, HID]    b2_ref: [1, 1]       o_ref:  [1, tb]
    # Layer 1 (MXU): [16,2] @ [2,tb] -> [16,tb]; K=2 padded inside the MXU for free.
    z1 = jnp.dot(w1_ref[...], x_ref[...], preferred_element_type=jnp.float32)
    z1 = z1 + b1_ref[...]
    # sigmoid via a single EUP transcendental: sigmoid(z) = 0.5*tanh(0.5*z) + 0.5
    h = 0.5 * jnp.tanh(0.5 * z1) + 0.5
    # Layer 2 (MXU): [1,16] @ [16,tb] -> [1,tb]
    z2 = jnp.dot(w2_ref[...], h, preferred_element_type=jnp.float32) + b2_ref[...]
    o_ref[...] = 0.5 * jnp.tanh(0.5 * z2) + 0.5


def prepare_params(w1, b1, w2, b2):
    """Cast / lay out the nn.Linear parameters ONCE (no zero padding needed).

    w1: [16, 2]  b1: [16]  w2: [1, 16]  b2: [1]
    """
    w1p = w1.astype(jnp.float32).reshape(HID, IN_F)
    b1p = b1.astype(jnp.float32).reshape(HID, 1)
    w2p = w2.astype(jnp.float32).reshape(1, HID)
    b2p = b2.astype(jnp.float32).reshape(1, 1)
    return w1p, b1p, w2p, b2p


def _tile_and_grid(B: int):
    """Lanes per grid step: a multiple of 128 (or the full batch when tiny),
    targeting >=2 steps for large B (v7x megacore) and <= MAX_TB lanes/step."""
    if B <= LANE:
        return B, 1                                   # single block == full batch
    half = pl.cdiv(B, 2)
    tb = min(MAX_TB, pl.cdiv(half, LANE) * LANE)      # lane-quantized half batch
    return tb, pl.cdiv(B, tb)                          # ragged last block is OK


@jax.jit
def mlp_forward_t(xt, w1p, b1p, w2p, b2p):
    """Feature-major entry point: xt [2, B] -> [1, B].  x crosses HBM exactly once."""
    B = xt.shape[1]
    tb, grid = _tile_and_grid(B)
    return pl.pallas_call(
        _mlp_kernel,
        out_shape=jax.ShapeDtypeStruct((1, B), jnp.float32),
        grid=(grid,),
        in_specs=[
            pl.BlockSpec((IN_F, tb), lambda i: (0, i)),    # x tile (batch on lanes)
            pl.BlockSpec((HID, IN_F), lambda i: (0, 0)),   # w1 (stays resident in VMEM)
            pl.BlockSpec((HID, 1), lambda i: (0, 0)),      # b1
            pl.BlockSpec((1, HID), lambda i: (0, 0)),      # w2
            pl.BlockSpec((1, 1), lambda i: (0, 0)),        # b2
        ],
        out_specs=pl.BlockSpec((1, tb), lambda i: (0, i)),  # lane-dense output
        compiler_params=pltpu.CompilerParams(
            dimension_semantics=("parallel",),              # batch tiles independent
            vmem_limit_bytes=VMEM_LIMIT,                    # headroom on v5e's 16 MiB default
        ),
    )(xt.astype(jnp.float32), w1p, b1p, w2p, b2p)


@jax.jit
def mlp_forward(x, w1p, b1p, w2p, b2p):
    """PyTorch-layout entry point: x [B, 2] -> [B, 1].

    The transpose to feature-major is the only prep copy (8 B/row); callers that
    can keep activations feature-major should use mlp_forward_t directly.
    """
    B = x.shape[0]
    out = mlp_forward_t(x.astype(jnp.float32).T, w1p, b1p, w2p, b2p)
    return out.reshape(B, 1)                                # free relayout


def _reference(x, w1, b1, w2, b2):
    h = jax.nn.sigmoid(x @ w1.T + b1)
    return jax.nn.sigmoid(h @ w2.T + b2)


if __name__ == "__main__":
    key = jax.random.PRNGKey(0)
    k_x, k_w1, k_b1, k_w2, k_b2, k_x2 = jax.random.split(key, 6)

    # Deterministic parameter init (shapes from nn.Linear(2,16) / nn.Linear(16,1)).
    lim1 = 1.0 / jnp.sqrt(2.0)
    w1 = jax.random.uniform(k_w1, (16, 2), jnp.float32, -lim1, lim1)
    b1 = jax.random.uniform(k_b1, (16,), jnp.float32, -lim1, lim1)
    lim2 = 1.0 / jnp.sqrt(16.0)
    w2 = jax.random.uniform(k_w2, (1, 16), jnp.float32, -lim2, lim2)
    b2 = jax.random.uniform(k_b2, (1,), jnp.float32, -lim2, lim2)

    # Lay out parameters once, outside the hot path.
    w1p, b1p, w2p, b2p = prepare_params(w1, b1, w2, b2)

    # Primary check: small batch (single block, lane dim == full batch).
    batch = 8
    x = jax.random.normal(k_x, (batch, 2), jnp.float32)
    out = jax.block_until_ready(mlp_forward(x, w1p, b1p, w2p, b2p))
    ref = _reference(x, w1, b1, w2, b2)
    assert out.shape == (batch, 1), out.shape
    assert jnp.allclose(out, ref, atol=1e-5, rtol=1e-5), (out, ref)

    # Secondary check: multi-tile grid with a ragged last block (grid=2, tb=1152).
    batch2 = 2050
    x2 = jax.random.normal(k_x2, (batch2, 2), jnp.float32)
    out2 = jax.block_until_ready(mlp_forward(x2, w1p, b1p, w2p, b2p))
    ref2 = _reference(x2, w1, b1, w2, b2)
    assert out2.shape == (batch2, 1), out2.shape
    assert jnp.allclose(out2, ref2, atol=1e-5, rtol=1e-5)

    print("KERNEL_OK")
</pallas_src>

<mosaic_0001>
module attributes {stable_mosaic.version = 11 : i64} {
  func.func @_mlp_kernel(%arg0: i32, %arg1: memref<2x8xf32, #tpu.memory_space<vmem>>, %arg2: memref<16x2xf32, #tpu.memory_space<vmem>>, %arg3: memref<16x1xf32, #tpu.memory_space<vmem>>, %arg4: memref<1x16xf32, #tpu.memory_space<vmem>>, %arg5: memref<1x1xf32, #tpu.memory_space<vmem>>, %arg6: memref<1x8xf32, #tpu.memory_space<vmem>>) attributes {dimension_semantics = [#tpu.dimension_semantics<parallel>], iteration_bounds = array<i64: 1>, scalar_prefetch = 0 : i64, scratch_operands = 0 : i64, tpu.core_type = #tpu.core_type<tc>, window_params = [{transform_indices = @transform_0, window_bounds = array<i64: 2, 8>}, {pipeline_mode = #tpu.pipeline_mode<synchronous>, transform_indices = @transform_1, window_bounds = array<i64: 16, 2>}, {pipeline_mode = #tpu.pipeline_mode<synchronous>, transform_indices = @transform_2, window_bounds = array<i64: 16, 1>}, {pipeline_mode = #tpu.pipeline_mode<synchronous>, transform_indices = @transform_3, window_bounds = array<i64: 1, 16>}, {pipeline_mode = #tpu.pipeline_mode<synchronous>, transform_indices = @transform_4, window_bounds = array<i64: 1, 1>}, {transform_indices = @transform_5, window_bounds = array<i64: 1, 8>}]} {
    %c0 = arith.constant 0 : index
    %c0_0 = arith.constant 0 : index
    %0 = vector.load %arg2[%c0, %c0_0] : memref<16x2xf32, #tpu.memory_space<vmem>>, vector<16x2xf32>
    %c0_1 = arith.constant 0 : index
    %c0_2 = arith.constant 0 : index
    %1 = vector.load %arg1[%c0_1, %c0_2] : memref<2x8xf32, #tpu.memory_space<vmem>>, vector<2x8xf32>
    %cst = arith.constant dense<0.000000e+00> : vector<16x8xf32>
    %2 = tpu.matmul %0, %1, %cst {dimension_numbers = #tpu.dot_dimension_numbers<[1], [0], [0], [1], [0, 0, 1, 1], [], []>} : vector<16x2xf32>, vector<2x8xf32>, vector<16x8xf32> -> vector<16x8xf32>
    %c0_3 = arith.constant 0 : index
    %c0_4 = arith.constant 0 : index
    %3 = vector.load %arg3[%c0_3, %c0_4] : memref<16x1xf32, #tpu.memory_space<vmem>>, vector<16x1xf32>
    %4 = vector.broadcast %3 : vector<16x1xf32> to vector<16x8xf32>
    %5 = arith.addf %2, %4 : vector<16x8xf32>
    %cst_5 = arith.constant 5.000000e-01 : f32
    %6 = vector.broadcast %cst_5 : f32 to vector<16x8xf32>
    %7 = arith.mulf %6, %5 : vector<16x8xf32>
    %8 = math.tanh %7 : vector<16x8xf32>
    %cst_6 = arith.constant 5.000000e-01 : f32
    %9 = vector.broadcast %cst_6 : f32 to vector<16x8xf32>
    %10 = arith.mulf %9, %8 : vector<16x8xf32>
    %cst_7 = arith.constant 5.000000e-01 : f32
    %11 = vector.broadcast %cst_7 : f32 to vector<16x8xf32>
    %12 = arith.addf %10, %11 : vector<16x8xf32>
    %c0_8 = arith.constant 0 : index
    %c0_9 = arith.constant 0 : index
    %13 = vector.load %arg4[%c0_8, %c0_9] : memref<1x16xf32, #tpu.memory_space<vmem>>, vector<1x16xf32>
    %cst_10 = arith.constant dense<0.000000e+00> : vector<1x8xf32>
    %14 = tpu.matmul %13, %12, %cst_10 {dimension_numbers = #tpu.dot_dimension_numbers<[1], [0], [0], [1], [0, 0, 1, 1], [], []>} : vector<1x16xf32>, vector<16x8xf32>, vector<1x8xf32> -> vector<1x8xf32>
    %c0_11 = arith.constant 0 : index
    %c0_12 = arith.constant 0 : index
    %15 = vector.load %arg5[%c0_11, %c0_12] : memref<1x1xf32, #tpu.memory_space<vmem>>, vector<1x1xf32>
    %16 = vector.broadcast %15 : vector<1x1xf32> to vector<1x8xf32>
    %17 = arith.addf %14, %16 : vector<1x8xf32>
    %cst_13 = arith.constant 5.000000e-01 : f32
    %18 = vector.broadcast %cst_13 : f32 to vector<1x8xf32>
    %19 = arith.mulf %18, %17 : vector<1x8xf32>
    %20 = math.tanh %19 : vector<1x8xf32>
    %cst_14 = arith.constant 5.000000e-01 : f32
    %21 = vector.broadcast %cst_14 : f32 to vector<1x8xf32>
    %22 = arith.mulf %21, %20 : vector<1x8xf32>
    %cst_15 = arith.constant 5.000000e-01 : f32
    %23 = vector.broadcast %cst_15 : f32 to vector<1x8xf32>
    %24 = arith.addf %22, %23 : vector<1x8xf32>
    %c0_16 = arith.constant 0 : index
    %c0_17 = arith.constant 0 : index
    %25 = vector.load %arg6[%c0_16, %c0_17] : memref<1x8xf32, #tpu.memory_space<vmem>>, vector<1x8xf32>
    tpu.vector_store %arg6[%c0_16, %c0_17], %24 {strides = array<i32>} : memref<1x8xf32, #tpu.memory_space<vmem>>, vector<1x8xf32>,
    return
  }
  func.func @transform_0(%arg0: i32) -> (i32, i32) {
    %c0_i32 = arith.constant 0 : i32
    %c0_i32_0 = arith.constant 0 : i32
    return %c0_i32, %arg0 : i32, i32
  }
  func.func @transform_1(%arg0: i32) -> (i32, i32) {
    %c0_i32 = arith.constant 0 : i32
    %c0_i32_0 = arith.constant 0 : i32
    %c0_i32_1 = arith.constant 0 : i32
    return %c0_i32, %c0_i32_0 : i32, i32
  }
  func.func @transform_2(%arg0: i32) -> (i32, i32) {
    %c0_i32 = arith.constant 0 : i32
    %c0_i32_0 = arith.constant 0 : i32
    %c0_i32_1 = arith.constant 0 : i32
    return %c0_i32, %c0_i32_0 : i32, i32
  }
  func.func @transform_3(%arg0: i32) -> (i32, i32) {
    %c0_i32 = arith.constant 0 : i32
    %c0_i32_0 = arith.constant 0 : i32
    %c0_i32_1 = arith.constant 0 : i32
    return %c0_i32, %c0_i32_0 : i32, i32
  }
  func.func @transform_4(%arg0: i32) -> (i32, i32) {
    %c0_i32 = arith.constant 0 : i32
    %c0_i32_0 = arith.constant 0 : i32
    %c0_i32_1 = arith.constant 0 : i32
    return %c0_i32, %c0_i32_0 : i32, i32
  }
  func.func @transform_5(%arg0: i32) -> (i32, i32) {
    %c0_i32 = arith.constant 0 : i32
    %c0_i32_0 = arith.constant 0 : i32
    return %c0_i32, %arg0 : i32, i32
  }
}

</mosaic_0001>

<llo_original>
// kernel: mlp_forward_t.1
$region0: #{mlp_forward_t.1}
  #allocation0 [shape = 'u32[]', space=smem, size = 0x4, offset = 0x4, fixed_abs, tag = 'smem constant byte address 0x4 - core index']
  #allocation1 [shape = 'u32[144,128]{1,0:T(1,128)}', space=vmem, size = 0x12000, scoped, tag = 'internal scratch']
  #allocation2 [shape = 'f32[1,1]{1,0:T(1,128)S(1)}', space=vmem, size = 0x200, scoped, tag = 'scoped memory for mlp_forward_t.1']
  %s0 = inlined_call_operand.vmem [shape: f32[2,8], index: 0, kind: input, shape index: {}]
  %s1 = inlined_call_operand.vmem [shape: f32[16,2], index: 1, kind: input, shape index: {}]
  %s2 = inlined_call_operand.vmem [shape: f32[16,1], index: 2, kind: input, shape index: {}]
  %s3 = inlined_call_operand.vmem [shape: f32[1,16], index: 3, kind: input, shape index: {}]
  %s4 = inlined_call_operand.<no memory space> [shape: f32[1,1], index: 4, kind: input, shape index: {}]
  %s5 = inlined_call_operand.hbm [shape: f32[1,8], index: 5, kind: output, shape index: {}]
  %s6 = sld [smem:[#allocation0]]
  $region30: #{mlp_forward_t.1} parent=0
    _
  %s8 = ssub.s32 1, %s6
  %s9 = scalar_select 0, %s8, %s6
  %v10 = vstv %s4
  %11 = vst [vmem:[#allocation2] sm:$0x1] %v10
  $region1: #{mlp_forward_t.1} parent=0
    #allocation3 [shape = 'u8[512]{0}', space=vmem, size = 0x400, scoped, tag = 'output window, operand 0, single buffered']
    #allocation4 [shape = 's32[1]{0}', space=sflag, size = 0x4, scoped, tag = 'scoped memory for mlp_forward_t.1']
    %12 = vsyncpa [#allocation4], 0
    // Predicated region
    $region2: #{mlp_forward_t.1} parent=1 // pred_check
      _
    $region3: #{mlp_forward_t.1} parent=1 // pred_check_branch
      %14 = sbr.rel (0) target = $region5
    $region4: #{mlp_forward_t.1} parent=1 // pred_region
      _
    $region5: #{mlp_forward_t.1} parent=1 // pred_fallthru
      _
    // Predicated region
    $region6: #{mlp_forward_t.1} parent=1 // pred_check
      _
    $region7: #{mlp_forward_t.1} parent=1 // pred_check_branch
      %16 = sbr.rel (0) target = $region9
    $region8: #{mlp_forward_t.1} parent=1 // pred_region
      _
    $region9: #{mlp_forward_t.1} parent=1 // pred_fallthru
      _
    // Predicated region
    $region10: #{mlp_forward_t.1} parent=1 // pred_check
      _
    $region11: #{mlp_forward_t.1} parent=1 // pred_check_branch
      %18 = sbr.rel (0) target = $region13
    $region12: #{mlp_forward_t.1} parent=1 // pred_region
      _
    $region13: #{mlp_forward_t.1} parent=1 // pred_fallthru
      _
    // Predicated region
    $region14: #{mlp_forward_t.1} parent=1 // pred_check
      _
    $region15: #{mlp_forward_t.1} parent=1 // pred_check_branch
      %20 = sbr.rel (0) target = $region17
    $region16: #{mlp_forward_t.1} parent=1 // pred_region
      _
    $region17: #{mlp_forward_t.1} parent=1 // pred_fallthru
      _
    // Predicated region
    $region18: #{mlp_forward_t.1} parent=1 // pred_check
      _
    $region19: #{mlp_forward_t.1} parent=1 // pred_check_branch
      %22 = sbr.rel (0) target = $region21
    $region20: #{mlp_forward_t.1} parent=1 // pred_region
      _
    $region21: #{mlp_forward_t.1} parent=1 // pred_fallthru
      _
    %v23 = vld [vmem:[%s1] sm:$0xff]
    %v24 = vld [vmem:[%s1 + $0x8] sm:$0xff]
    %v25 = vld [vmem:[%s0] sm:$0x3]
    %v26 = vld [vmem:[%s2] sm:$0xff]
    %v27 = vld [vmem:[%s2 + $0x8] sm:$0xff]
    %29 = vset.pattern.permute.xlu0 0
    %30 = vperm.xlu0 %29, %v26
    %v31 = vpop.permute.xlu0 %30
    %34 = vset.pattern.permute.xlu0 0
    %35 = vperm.xlu0 %34, %v27
    %v36 = vpop.permute.xlu0 %35
    %vm38 = vcmask 15360
    %v40 = vsel %vm38, %v23, 0
    %v43 = vsel %vm38, %v24, 0
    %vm45 = vcmask 1041408
    %v47 = vsel %vm45, %v25, 0
    %49 = vmatprep.subr.mxu0 0.0
    %50 = vmatpush1.msra.mxu0 %v47
    %51 = vmatprep.subr.mxu0 0.0
    %52 = vmatpush1.msra.mxu0 0.0
    %53 = vmatprep.subr.mxu0 0.0
    %54 = vmatpush1.msra.mxu0 0.0
    %55 = vmatprep.subr.mxu0 0.0
    %56 = vmatpush1.msra.mxu0 0.0
    %57 = vmatprep.subr.mxu0 0.0
    %58 = vmatpush1.msra.mxu0 0.0
    %59 = vmatprep.subr.mxu0 0.0
    %60 = vmatpush1.msra.mxu0 0.0
    %61 = vmatprep.subr.mxu0 0.0
    %62 = vmatpush1.msra.mxu0 0.0
    %63 = vmatprep.subr.mxu0 0.0
    %64 = vmatpush1.msra.mxu0 0.0
    %65 = vmatprep.subr.mxu0 0.0
    %66 = vmatpush1.msra.mxu0 0.0
    %67 = vmatprep.subr.mxu0 0.0
    %68 = vmatpush1.msra.mxu0 0.0
    %69 = vmatprep.subr.mxu0 0.0
    %70 = vmatpush1.msra.mxu0 0.0
    %71 = vmatprep.subr.mxu0 0.0
    %72 = vmatpush1.msra.mxu0 0.0
    %73 = vmatprep.subr.mxu0 0.0
    %74 = vmatpush1.msra.mxu0 0.0
    %75 = vmatprep.subr.mxu0 0.0
    %76 = vmatpush1.msra.mxu0 0.0
    %77 = vmatprep.subr.mxu0 0.0
    %78 = vmatpush1.msra.mxu0 0.0
    %79 = vmatprep.subr.mxu0 0.0
    %80 = vmatpush1.msra.mxu0 0.0
    %81 = vmatprep.subr.mxu0 0.0
    %82 = vmatpush1.msra.mxu0 0.0
    %83 = vmatprep.subr.mxu0 0.0
    %84 = vmatpush1.msra.mxu0 0.0
    %85 = vmatprep.subr.mxu0 0.0
    %86 = vmatpush1.msra.mxu0 0.0
    %87 = vmatprep.subr.mxu0 0.0
    %88 = vmatpush1.msra.mxu0 0.0
    %89 = vmatprep.subr.mxu0 0.0
    %90 = vmatpush1.msra.mxu0 0.0
    %91 = vmatprep.subr.mxu0 0.0
    %92 = vmatpush1.msra.mxu0 0.0
    %93 = vmatprep.subr.mxu0 0.0
    %94 = vmatpush1.msra.mxu0 0.0
    %95 = vmatprep.subr.mxu0 0.0
    %96 = vmatpush1.msra.mxu0 0.0
    %97 = vmatprep.subr.mxu0 0.0
    %98 = vmatpush1.msra.mxu0 0.0
    %99 = vmatprep.subr.mxu0 0.0
    %100 = vmatpush1.msra.mxu0 0.0
    %101 = vmatprep.subr.mxu0 0.0
    %102 = vmatpush1.msra.mxu0 0.0
    %103 = vmatprep.subr.mxu0 0.0
    %104 = vmatpush1.msra.mxu0 0.0
    %105 = vmatprep.subr.mxu0 0.0
    %106 = vmatpush1.msra.mxu0 0.0
    %107 = vmatprep.subr.mxu0 0.0
    %108 = vmatpush1.msra.mxu0 0.0
    %109 = vmatprep.subr.mxu0 0.0
    %110 = vmatpush1.msra.mxu0 0.0
    %111 = vmatprep.subr.mxu0 0.0
    %112 = vmatpush1.msra.mxu0 0.0
    %113 = vmatprep.mubr.f32.mxu0 0.0
    %114 = vmatmul.mubr.f32.gmra.mrb[0].mxu0 %v40
    %v115 = vpop.f32.mrb[0].mxu0
    %v116 = vadd.f32 %v31, %v115
    %v117 = vpop.f32.mrb[0].mxu0
    %118 = vmatprep.mubr.f32.mxu0 0.0
    %119 = vmatmul.mubr.f32.gmra.mrb[0].mxu0 %v43
    %v120 = vpop.f32.mrb[0].mxu0
    %v121 = vadd.f32 %v36, %v120
    %v122 = vpop.f32.mrb[0].mxu0
    %123 = vdwg.mxu0
    %v124 = vmul.f32 %v116, 0.5
    %v125 = vmul.f32 %v121, 0.5
    %v126 = vtanh.pop %v124
    %v127 = vtanh.pop %v125
    %v128 = vmul.f32 %v126, 0.5
    %v129 = vmul.f32 %v127, 0.5
    %v130 = vadd.f32 %v128, 0.5
    %v131 = vadd.f32 %v129, 0.5
    %v132 = vld [vmem:[%s3] sm:$0x1]
    %v133 = vld [vmem:[#allocation2] sm:$0x1]
    %135 = vset.pattern.permute.xlu0 0
    %136 = vperm.xlu0 %135, %v133
    %v137 = vpop.permute.xlu0 %136
    %v139 = vlaneseq
    %v140 = vshrl.u32 %v139, 7
    %v141 = vsub.s32 0, %v140
    %v142 = vrot.slane %v137, %v141
    %vm143 = vcmask 130048
    %v145 = vsel %vm143, %v132, 0
    %147 = vmatprep.subr.mxu0 0.0
    %148 = vmatpush1.msra.mxu0 %v130
    %149 = vmatprep.subr.mxu0 0.0
    %150 = vmatpush1.msra.mxu0 %v131
    %151 = vmatprep.subr.mxu0 0.0
    %152 = vmatpush1.msra.mxu0 0.0
    %153 = vmatprep.subr.mxu0 0.0
    %154 = vmatpush1.msra.mxu0 0.0
    %155 = vmatprep.subr.mxu0 0.0
    %156 = vmatpush1.msra.mxu0 0.0
    %157 = vmatprep.subr.mxu0 0.0
    %158 = vmatpush1.msra.mxu0 0.0
    %159 = vmatprep.subr.mxu0 0.0
    %160 = vmatpush1.msra.mxu0 0.0
    %161 = vmatprep.subr.mxu0 0.0
    %162 = vmatpush1.msra.mxu0 0.0
    %163 = vmatprep.subr.mxu0 0.0
    %164 = vmatpush1.msra.mxu0 0.0
    %165 = vmatprep.subr.mxu0 0.0
    %166 = vmatpush1.msra.mxu0 0.0
    %167 = vmatprep.subr.mxu0 0.0
    %168 = vmatpush1.msra.mxu0 0.0
    %169 = vmatprep.subr.mxu0 0.0
    %170 = vmatpush1.msra.mxu0 0.0
    %171 = vmatprep.subr.mxu0 0.0
    %172 = vmatpush1.msra.mxu0 0.0
    %173 = vmatprep.subr.mxu0 0.0
    %174 = vmatpush1.msra.mxu0 0.0
    %175 = vmatprep.subr.mxu0 0.0
    %176 = vmatpush1.msra.mxu0 0.0
    %177 = vmatprep.subr.mxu0 0.0
    %178 = vmatpush1.msra.mxu0 0.0
    %179 = vmatprep.subr.mxu0 0.0
    %180 = vmatpush1.msra.mxu0 0.0
    %181 = vmatprep.subr.mxu0 0.0
    %182 = vmatpush1.msra.mxu0 0.0
    %183 = vmatprep.subr.mxu0 0.0
    %184 = vmatpush1.msra.mxu0 0.0
    %185 = vmatprep.subr.mxu0 0.0
    %186 = vmatpush1.msra.mxu0 0.0
    %187 = vmatprep.subr.mxu0 0.0
    %188 = vmatpush1.msra.mxu0 0.0
    %189 = vmatprep.subr.mxu0 0.0
    %190 = vmatpush1.msra.mxu0 0.0
    %191 = vmatprep.subr.mxu0 0.0
    %192 = vmatpush1.msra.mxu0 0.0
    %193 = vmatprep.subr.mxu0 0.0
    %194 = vmatpush1.msra.mxu0 0.0
    %195 = vmatprep.subr.mxu0 0.0
    %196 = vmatpush1.msra.mxu0 0.0
    %197 = vmatprep.subr.mxu0 0.0
    %198 = vmatpush1.msra.mxu0 0.0
    %199 = vmatprep.subr.mxu0 0.0
    %200 = vmatpush1.msra.mxu0 0.0
    %201 = vmatprep.subr.mxu0 0.0
    %202 = vmatpush1.msra.mxu0 0.0
    %203 = vmatprep.subr.mxu0 0.0
    %204 = vmatpush1.msra.mxu0 0.0
    %205 = vmatprep.subr.mxu0 0.0
    %206 = vmatpush1.msra.mxu0 0.0
    %207 = vmatprep.subr.mxu0 0.0
    %208 = vmatpush1.msra.mxu0 0.0
    %209 = vmatprep.subr.mxu0 0.0
    %210 = vmatpush1.msra.mxu0 0.0
    %211 = vmatprep.mubr.f32.mxu0 0.0
    %212 = vmatmul.mubr.f32.gmra.mrb[0].mxu0 %v145
    %v213 = vpop.f32.mrb[0].mxu0
    %v214 = vadd.f32 %v142, %v213
    %v215 = vpop.f32.mrb[0].mxu0
    %216 = vdwg.mxu0
    %v217 = vmul.f32 %v214, 0.5
    %v218 = vtanh.pop %v217
    %v219 = vmul.f32 %v218, 0.5
    %v220 = vadd.f32 %v219, 0.5
    %vm221 = vcmask 57344
    %222 = vst.msk [vmem:[#allocation3] sm:$0x1] %vm221, %v220
    // Predicated region
    $region22: #{mlp_forward_t.1} parent=1 // pred_check
      _
    $region23: #{mlp_forward_t.1} parent=1 // pred_check_branch
      %224 = sbr.rel (0) target = $region25
    $region24: #{mlp_forward_t.1} parent=1 // pred_region
      %s226 = ssub.s32 16, 16
      %227 = vsyncadd [#allocation4], %s226
      %s229 = sshll.u32 [#allocation3], 4
      %s230 = int_to_ptr.vmem [resolvable:$true] %s229
      %232 = dma.vmem_to_hbm [thread:$0]  %s230, 16, %s5, [#allocation4]
    $region25: #{mlp_forward_t.1} parent=1 // pred_fallthru
      _
    // Predicated region
    $region26: #{mlp_forward_t.1} parent=1 // pred_check
      _
    $region27: #{mlp_forward_t.1} parent=1 // pred_check_branch
      %234 = sbr.rel (0) target = $region29
    $region28: #{mlp_forward_t.1} parent=1 // pred_region
      %235 = dma.done [#allocation4], 16
    $region29: #{mlp_forward_t.1} parent=1 // pred_fallthru
      _
    %236 = vsyncpa [#allocation4], 1

</llo_original>
